<compile_context>
chip_gen: v7x
topology: tpu7x:2x2x1
jax: 0.10.0
libtpu: 0.0.40
codegen_flags: <defaults>
</compile_context>

<pallas_src>
import jax
import jax.numpy as jnp
from jax import lax
from jax.experimental import pallas as pl
from jax.experimental.pallas import tpu as pltpu


def _round_up(n, m):
    return ((n + m - 1) // m) * m


def _make_kernel(with_logits):
    def kernel(x_ref, w_ref, b_ref, res_ref, *maybe_y_ref):
        x = x_ref[...]                      # (tb, F)
        w = w_ref[...]                      # (O, F)  -- resident across steps
        b = b_ref[...]                      # (O, 1)  -- resident across steps
        # y^T = W @ x^T without materializing any transpose: contract F on both.
        yt = lax.dot_general(
            w, x,
            dimension_numbers=(((1,), (1,)), ((), ())),
            preferred_element_type=jnp.float32,
        ) + b                               # (O, tb) f32, batch on the lane axis
        # Numerically stable softmax over output_dim (axis=0 in this layout).
        m = jnp.max(yt, axis=0, keepdims=True)       # (1, tb)
        e = jnp.exp(yt - m)
        s = jnp.sum(e, axis=0, keepdims=True)        # (1, tb)
        res_ref[...] = (e / s).astype(res_ref.dtype)
        if with_logits:
            maybe_y_ref[0][...] = yt.astype(maybe_y_ref[0].dtype)
    return kernel


def _choose_batch_tile(B, F, O, budget_bytes):
    """Largest tb (multiple of 128) whose per-step working set fits the budget."""
    lane_f = _round_up(F, 128)      # x tile lane padding
    sub_o = _round_up(O, 8)         # output tile sublane padding
    # Double-buffered x tile + two double-buffered (O, tb) outputs, all f32.
    per_row = 4 * (2 * lane_f + 2 * 2 * sub_o)
    # Resident weight + bias (still double-buffered by the pipeline).
    fixed = 4 * 2 * (sub_o * lane_f + 8 * 128)
    tb = (budget_bytes - fixed) // per_row
    tb = max(128, (tb // 128) * 128)
    # No point tiling beyond the (padded) batch.
    tb = min(tb, _round_up(B, 128))
    return int(tb)


def linear_text_forward(x, weight, bias, *, tb=None, return_logits=True,
                        vmem_budget_bytes=24 * 1024 * 1024):
    """x: (B, F) f32, weight: (O, F), bias: (O,) -> (softmax(y, axis=1), y)."""
    B, F = x.shape
    O = weight.shape[0]

    if tb is None:
        tb = _choose_batch_tile(B, F, O, vmem_budget_bytes)
    tb = max(128, _round_up(tb, 128))   # tb is the lane axis of output blocks

    Bp = _round_up(B, tb)
    if Bp != B:
        # Padded rows produce softmax(bias) junk columns; sliced off below.
        x = jnp.pad(x, ((0, Bp - B), (0, 0)))

    bias2d = bias.reshape(O, 1)
    grid = (Bp // tb,)

    out_shape = [jax.ShapeDtypeStruct((O, Bp), jnp.float32)]
    out_specs = [pl.BlockSpec((O, tb), lambda i: (0, i))]
    if return_logits:
        out_shape.append(jax.ShapeDtypeStruct((O, Bp), jnp.float32))
        out_specs.append(pl.BlockSpec((O, tb), lambda i: (0, i)))

    n_out = len(out_shape)
    cost = pl.CostEstimate(
        flops=2 * Bp * F * O,
        transcendentals=Bp * O,
        bytes_accessed=4 * (Bp * F + O * F + O + n_out * Bp * O),
    )

    outs = pl.pallas_call(
        _make_kernel(return_logits),
        out_shape=tuple(out_shape),
        grid_spec=pltpu.PrefetchScalarGridSpec(
            num_scalar_prefetch=0,
            grid=grid,
            in_specs=[
                pl.BlockSpec((tb, F), lambda i: (i, 0)),   # x: tiled over batch
                pl.BlockSpec((O, F), lambda i: (0, 0)),    # weight: resident
                pl.BlockSpec((O, 1), lambda i: (0, 0)),    # bias: resident
            ],
            out_specs=out_specs,
        ),
        compiler_params=pltpu.CompilerParams(
            dimension_semantics=("parallel",),
            vmem_limit_bytes=32 * 1024 * 1024,
        ),
        cost_estimate=cost,
    )(x, weight, bias2d)

    # Back to the module's (B, O) layout; drop padded batch rows.
    res = outs[0].T[:B]
    if return_logits:
        y = outs[1].T[:B]
        return res, y
    return res


def init_linear_params(key, feature_len, output_dim=6):
    """Deterministic init mimicking torch.nn.Linear (uniform +/- 1/sqrt(fan_in))."""
    kw, kb = jax.random.split(key)
    bound = 1.0 / (feature_len ** 0.5)
    weight = jax.random.uniform(
        kw, (output_dim, feature_len), jnp.float32, -bound, bound)
    bias = jax.random.uniform(
        kb, (output_dim,), jnp.float32, -bound, bound)
    return weight, bias


if __name__ == "__main__":
    key = jax.random.PRNGKey(0)
    k_x, k_p, k_x2 = jax.random.split(key, 3)

    feature_len = 32
    output_dim = 6
    weight, bias = init_linear_params(k_p, feature_len, output_dim)

    # Case 1: small batch, budget-derived tile -> single grid step + padding.
    batch = 16
    x = jax.random.normal(k_x, (batch, feature_len), jnp.float32)
    res, y = linear_text_forward(x, weight, bias)
    jax.block_until_ready((res, y))

    y_ref = x @ weight.T + bias
    res_ref = jax.nn.softmax(y_ref, axis=1)
    assert res.shape == (batch, output_dim) and y.shape == (batch, output_dim)
    assert jnp.allclose(y, y_ref, atol=1e-5, rtol=1e-5)
    assert jnp.allclose(res, res_ref, atol=1e-5, rtol=1e-5)

    # Case 2: batch not a multiple of the tile + explicit tb=128 -> multi-step
    # grid; also exercises the softmax-only (dropped-logits) output path.
    batch2 = 300
    x2 = jax.random.normal(k_x2, (batch2, feature_len), jnp.float32)
    res2, y2 = linear_text_forward(x2, weight, bias, tb=128)
    res2_only = linear_text_forward(x2, weight, bias, tb=128, return_logits=False)
    jax.block_until_ready((res2, y2, res2_only))

    y2_ref = x2 @ weight.T + bias
    res2_ref = jax.nn.softmax(y2_ref, axis=1)
    assert jnp.allclose(y2, y2_ref, atol=1e-5, rtol=1e-5)
    assert jnp.allclose(res2, res2_ref, atol=1e-5, rtol=1e-5)
    assert jnp.allclose(res2_only, res2_ref, atol=1e-5, rtol=1e-5)

    print("KERNEL_OK")
</pallas_src>

<mosaic_0001>
module attributes {stable_mosaic.version = 11 : i64} {
  func.func @kernel(%arg0: i32, %arg1: memref<128x32xf32, #tpu.memory_space<vmem>>, %arg2: memref<6x32xf32, #tpu.memory_space<vmem>>, %arg3: memref<6x1xf32, #tpu.memory_space<vmem>>, %arg4: memref<6x128xf32, #tpu.memory_space<vmem>>, %arg5: memref<6x128xf32, #tpu.memory_space<vmem>>) attributes {dimension_semantics = [#tpu.dimension_semantics<parallel>], iteration_bounds = array<i64: 1>, scalar_prefetch = 0 : i64, scratch_operands = 0 : i64, tpu.core_type = #tpu.core_type<tc>, window_params = [{transform_indices = @transform_0, window_bounds = array<i64: 128, 32>}, {pipeline_mode = #tpu.pipeline_mode<synchronous>, transform_indices = @transform_1, window_bounds = array<i64: 6, 32>}, {pipeline_mode = #tpu.pipeline_mode<synchronous>, transform_indices = @transform_2, window_bounds = array<i64: 6, 1>}, {transform_indices = @transform_3, window_bounds = array<i64: 6, 128>}, {transform_indices = @transform_4, window_bounds = array<i64: 6, 128>}]} {
    %c0 = arith.constant 0 : index
    %c0_0 = arith.constant 0 : index
    %0 = vector.load %arg1[%c0, %c0_0] : memref<128x32xf32, #tpu.memory_space<vmem>>, vector<128x32xf32>
    %c0_1 = arith.constant 0 : index
    %c0_2 = arith.constant 0 : index
    %1 = vector.load %arg2[%c0_1, %c0_2] : memref<6x32xf32, #tpu.memory_space<vmem>>, vector<6x32xf32>
    %c0_3 = arith.constant 0 : index
    %c0_4 = arith.constant 0 : index
    %2 = vector.load %arg3[%c0_3, %c0_4] : memref<6x1xf32, #tpu.memory_space<vmem>>, vector<6x1xf32>
    %cst = arith.constant dense<0.000000e+00> : vector<6x128xf32>
    %3 = tpu.matmul %1, %0, %cst {dimension_numbers = #tpu.dot_dimension_numbers<[1], [1], [0], [0], [0, 0, 1, 0], [], []>} : vector<6x32xf32>, vector<128x32xf32>, vector<6x128xf32> -> vector<6x128xf32>
    %4 = vector.broadcast %2 : vector<6x1xf32> to vector<6x128xf32>
    %5 = arith.addf %3, %4 : vector<6x128xf32>
    %cst_5 = arith.constant dense<0xFF800000> : vector<128xf32>
    %6 = vector.multi_reduction <maximumf>, %5, %cst_5 [0] : vector<6x128xf32> to vector<128xf32>
    %7 = vector.shape_cast %6 : vector<128xf32> to vector<1x128xf32>
    %8 = vector.broadcast %7 : vector<1x128xf32> to vector<6x128xf32>
    %9 = arith.subf %5, %8 : vector<6x128xf32>
    %10 = math.exp %9 : vector<6x128xf32>
    %cst_6 = arith.constant dense<0.000000e+00> : vector<128xf32>
    %11 = vector.multi_reduction <add>, %10, %cst_6 [0] : vector<6x128xf32> to vector<128xf32>
    %12 = vector.shape_cast %11 : vector<128xf32> to vector<1x128xf32>
    %13 = vector.broadcast %12 : vector<1x128xf32> to vector<6x128xf32>
    %14 = arith.divf %10, %13 : vector<6x128xf32>
    %c0_7 = arith.constant 0 : index
    %c0_8 = arith.constant 0 : index
    %15 = vector.load %arg4[%c0_7, %c0_8] : memref<6x128xf32, #tpu.memory_space<vmem>>, vector<6x128xf32>
    tpu.vector_store %arg4[%c0_7, %c0_8], %14 {strides = array<i32>} : memref<6x128xf32, #tpu.memory_space<vmem>>, vector<6x128xf32>,
    %c0_9 = arith.constant 0 : index
    %c0_10 = arith.constant 0 : index
    %16 = vector.load %arg5[%c0_9, %c0_10] : memref<6x128xf32, #tpu.memory_space<vmem>>, vector<6x128xf32>
    tpu.vector_store %arg5[%c0_9, %c0_10], %5 {strides = array<i32>} : memref<6x128xf32, #tpu.memory_space<vmem>>, vector<6x128xf32>,
    return
  }
  func.func @transform_0(%arg0: i32) -> (i32, i32) {
    %c0_i32 = arith.constant 0 : i32
    %c0_i32_0 = arith.constant 0 : i32
    return %arg0, %c0_i32 : i32, i32
  }
  func.func @transform_1(%arg0: i32) -> (i32, i32) {
    %c0_i32 = arith.constant 0 : i32
    %c0_i32_0 = arith.constant 0 : i32
    %c0_i32_1 = arith.constant 0 : i32
    return %c0_i32, %c0_i32_0 : i32, i32
  }
  func.func @transform_2(%arg0: i32) -> (i32, i32) {
    %c0_i32 = arith.constant 0 : i32
    %c0_i32_0 = arith.constant 0 : i32
    %c0_i32_1 = arith.constant 0 : i32
    return %c0_i32, %c0_i32_0 : i32, i32
  }
  func.func @transform_3(%arg0: i32) -> (i32, i32) {
    %c0_i32 = arith.constant 0 : i32
    %c0_i32_0 = arith.constant 0 : i32
    return %c0_i32, %arg0 : i32, i32
  }
  func.func @transform_4(%arg0: i32) -> (i32, i32) {
    %c0_i32 = arith.constant 0 : i32
    %c0_i32_0 = arith.constant 0 : i32
    return %c0_i32, %arg0 : i32, i32
  }
}

</mosaic_0001>

<llo_original>
// kernel: tpu_custom_call.1
$region0: #{tpu_custom_call.1}
  #allocation0 [shape = 'u32[]', space=smem, size = 0x4, offset = 0x4, fixed_abs, tag = 'smem constant byte address 0x4 - core index']
  #allocation1 [shape = 'u32[144,128]{1,0:T(1,128)}', space=vmem, size = 0x12000, scoped, tag = 'internal scratch']
  %s0 = inlined_call_operand.vmem [shape: f32[128,32], index: 0, kind: input, shape index: {}]
  %s1 = inlined_call_operand.vmem [shape: f32[6,32], index: 1, kind: input, shape index: {}]
  %s2 = inlined_call_operand.vmem [shape: f32[6,1], index: 2, kind: input, shape index: {}]
  %s3 = inlined_call_operand.hbm [shape: f32[6,128], index: 3, kind: output, shape index: {0}]
  %s4 = inlined_call_operand.hbm [shape: f32[6,128], index: 4, kind: output, shape index: {1}]
  %5 = xla_tuple %s3, %s4
  %s6 = sld [smem:[#allocation0]]
  $region30: #{tpu_custom_call.1} parent=0
    _
  %s8 = ssub.s32 1, %s6
  %s9 = scalar_select 0, %s8, %s6
  $region1: #{tpu_custom_call.1} parent=0
    #allocation2 [shape = 'u8[4096]{0}', space=vmem, size = 0x1000, scoped, tag = 'output window, operand 0, single buffered']
    #allocation3 [shape = 's32[1]{0}', space=sflag, size = 0x4, scoped, tag = 'scoped memory for tpu_custom_call.1']
    #allocation4 [shape = 'u8[4096]{0}', space=vmem, size = 0x1000, scoped, tag = 'output window, operand 1, single buffered']
    #allocation5 [shape = 's32[1]{0}', space=sflag, size = 0x4, scoped, tag = 'scoped memory for tpu_custom_call.1']
    %10 = vsyncpa [#allocation3], 0
    %11 = vsyncpa [#allocation5], 0
    // Predicated region
    $region2: #{tpu_custom_call.1} parent=1 // pred_check
      _
    $region3: #{tpu_custom_call.1} parent=1 // pred_check_branch
      %13 = sbr.rel (0) target = $region5
    $region4: #{tpu_custom_call.1} parent=1 // pred_region
      _
    $region5: #{tpu_custom_call.1} parent=1 // pred_fallthru
      _
    // Predicated region
    $region6: #{tpu_custom_call.1} parent=1 // pred_check
      _
    $region7: #{tpu_custom_call.1} parent=1 // pred_check_branch
      %15 = sbr.rel (0) target = $region9
    $region8: #{tpu_custom_call.1} parent=1 // pred_region
      _
    $region9: #{tpu_custom_call.1} parent=1 // pred_fallthru
      _
    // Predicated region
    $region10: #{tpu_custom_call.1} parent=1 // pred_check
      _
    $region11: #{tpu_custom_call.1} parent=1 // pred_check_branch
      %17 = sbr.rel (0) target = $region13
    $region12: #{tpu_custom_call.1} parent=1 // pred_region
      _
    $region13: #{tpu_custom_call.1} parent=1 // pred_fallthru
      _
    %v18 = vld [vmem:[%s0] sm:$0xff]
    %v19 = vld [vmem:[%s0 + $0x8] sm:$0xff]
    %v20 = vld [vmem:[%s0 + $0x10] sm:$0xff]
    %v21 = vld [vmem:[%s0 + $0x18] sm:$0xff]
    %v22 = vld [vmem:[%s0 + $0x20] sm:$0xff]
    %v23 = vld [vmem:[%s0 + $0x28] sm:$0xff]
    %v24 = vld [vmem:[%s0 + $0x30] sm:$0xff]
    %v25 = vld [vmem:[%s0 + $0x38] sm:$0xff]
    %v26 = vld [vmem:[%s0 + $0x40] sm:$0xff]
    %v27 = vld [vmem:[%s0 + $0x48] sm:$0xff]
    %v28 = vld [vmem:[%s0 + $0x50] sm:$0xff]
    %v29 = vld [vmem:[%s0 + $0x58] sm:$0xff]
    %v30 = vld [vmem:[%s0 + $0x60] sm:$0xff]
    %v31 = vld [vmem:[%s0 + $0x68] sm:$0xff]
    %v32 = vld [vmem:[%s0 + $0x70] sm:$0xff]
    %v33 = vld [vmem:[%s0 + $0x78] sm:$0xff]
    %v34 = vld [vmem:[%s1] sm:$0x3f]
    %v35 = vld [vmem:[%s2] sm:$0x3f]
    %37 = vset.pattern.permute.xlu0 0
    %38 = vperm.xlu0 %37, %v35
    %v39 = vpop.permute.xlu0 %38
    %vm41 = vcmask 261120
    %v43 = vsel %vm41, %v34, 0
    %v46 = vsel %vm41, %v18, 0
    %v49 = vsel %vm41, %v19, 0
    %v52 = vsel %vm41, %v20, 0
    %v55 = vsel %vm41, %v21, 0
    %v58 = vsel %vm41, %v22, 0
    %v61 = vsel %vm41, %v23, 0
    %v64 = vsel %vm41, %v24, 0
    %v67 = vsel %vm41, %v25, 0
    %v70 = vsel %vm41, %v26, 0
    %v73 = vsel %vm41, %v27, 0
    %v76 = vsel %vm41, %v28, 0
    %v79 = vsel %vm41, %v29, 0
    %v82 = vsel %vm41, %v30, 0
    %v85 = vsel %vm41, %v31, 0
    %v88 = vsel %vm41, %v32, 0
    %v91 = vsel %vm41, %v33, 0
    %93 = vmatprep.subr.mxu0 0.0
    %94 = vmatpush1.xpose.msra.mxu0 %v46
    %95 = vmatprep.subr.mxu0 0.0
    %96 = vmatpush1.xpose.msra.mxu0 %v49
    %97 = vmatprep.subr.mxu0 0.0
    %98 = vmatpush1.xpose.msra.mxu0 %v52
    %99 = vmatprep.subr.mxu0 0.0
    %100 = vmatpush1.xpose.msra.mxu0 %v55
    %101 = vmatprep.subr.mxu0 0.0
    %102 = vmatpush1.xpose.msra.mxu0 %v58
    %103 = vmatprep.subr.mxu0 0.0
    %104 = vmatpush1.xpose.msra.mxu0 %v61
    %105 = vmatprep.subr.mxu0 0.0
    %106 = vmatpush1.xpose.msra.mxu0 %v64
    %107 = vmatprep.subr.mxu0 0.0
    %108 = vmatpush1.xpose.msra.mxu0 %v67
    %109 = vmatprep.subr.mxu0 0.0
    %110 = vmatpush1.xpose.msra.mxu0 %v70
    %111 = vmatprep.subr.mxu0 0.0
    %112 = vmatpush1.xpose.msra.mxu0 %v73
    %113 = vmatprep.subr.mxu0 0.0
    %114 = vmatpush1.xpose.msra.mxu0 %v76
    %115 = vmatprep.subr.mxu0 0.0
    %116 = vmatpush1.xpose.msra.mxu0 %v79
    %117 = vmatprep.subr.mxu0 0.0
    %118 = vmatpush1.xpose.msra.mxu0 %v82
    %119 = vmatprep.subr.mxu0 0.0
    %120 = vmatpush1.xpose.msra.mxu0 %v85
    %121 = vmatprep.subr.mxu0 0.0
    %122 = vmatpush1.xpose.msra.mxu0 %v88
    %123 = vmatprep.subr.mxu0 0.0
    %124 = vmatpush1.xpose.msra.mxu0 %v91
    %125 = vmatprep.subr.mxu0 0.0
    %126 = vmatpush1.xpose.msra.mxu0 0.0
    %127 = vmatprep.subr.mxu0 0.0
    %128 = vmatpush1.xpose.msra.mxu0 0.0
    %129 = vmatprep.subr.mxu0 0.0
    %130 = vmatpush1.xpose.msra.mxu0 0.0
    %131 = vmatprep.subr.mxu0 0.0
    %132 = vmatpush1.xpose.msra.mxu0 0.0
    %133 = vmatprep.subr.mxu0 0.0
    %134 = vmatpush1.xpose.msra.mxu0 0.0
    %135 = vmatprep.subr.mxu0 0.0
    %136 = vmatpush1.xpose.msra.mxu0 0.0
    %137 = vmatprep.subr.mxu0 0.0
    %138 = vmatpush1.xpose.msra.mxu0 0.0
    %139 = vmatprep.subr.mxu0 0.0
    %140 = vmatpush1.xpose.msra.mxu0 0.0
    %141 = vmatprep.subr.mxu0 0.0
    %142 = vmatpush1.xpose.msra.mxu0 0.0
    %143 = vmatprep.subr.mxu0 0.0
    %144 = vmatpush1.xpose.msra.mxu0 0.0
    %145 = vmatprep.subr.mxu0 0.0
    %146 = vmatpush1.xpose.msra.mxu0 0.0
    %147 = vmatprep.subr.mxu0 0.0
    %148 = vmatpush1.xpose.msra.mxu0 0.0
    %149 = vmatprep.subr.mxu0 0.0
    %150 = vmatpush1.xpose.msra.mxu0 0.0
    %151 = vmatprep.subr.mxu0 0.0
    %152 = vmatpush1.xpose.msra.mxu0 0.0
    %153 = vmatprep.subr.mxu0 0.0
    %154 = vmatpush1.xpose.msra.mxu0 0.0
    %155 = vmatprep.subr.mxu0 0.0
    %156 = vmatpush1.xpose.msra.mxu0 0.0
    %157 = vmatprep.mubr.f32.mxu0 0.0
    %158 = vmatmul.mubr.f32.gmra.mrb[0].mxu0 %v43
    %v159 = vpop.f32.mrb[0].mxu0
    %v160 = vadd.f32 %v39, %v159
    %v161 = vpop.f32.mrb[0].mxu0
    %162 = vdwg.mxu0
    %vm163 = vcmask 1045504
    %v164 = vsel %vm163, %v160, -inf
    %v165 = vrot.slane %v164, 4
    %v166 = vmax.f32 %v164, %v165
    %v167 = vrot.slane %v166, 2
    %v168 = vmax.f32 %v166, %v167
    %v169 = vrot.slane %v168, 1
    %v170 = vmax.f32 %v168, %v169
    %v171 = vsub.f32 %v160, %v170
    %v172 = vmul.f32 %v171, 1.442695
    %v173 = vpow.pop %v172
    %v174 = vsel %vm163, %v173, 0.0
    %v175 = vrot.slane %v174, 4
    %v176 = vadd.f32 %v174, %v175
    %v177 = vrot.slane %v176, 2
    %v178 = vadd.f32 %v176, %v177
    %v179 = vrot.slane %v178, 1
    %v180 = vadd.f32 %v178, %v179
    %v181 = vrcp.pop %v180
    %v182 = vmul.f32 %v173, %v181
    %183 = vst [vmem:[#allocation2] sm:$0x3f] %v182
    %184 = vst [vmem:[#allocation4] sm:$0x3f] %v160
    // Predicated region
    $region14: #{tpu_custom_call.1} parent=1 // pred_check
      _
    $region15: #{tpu_custom_call.1} parent=1 // pred_check_branch
      %186 = sbr.rel (0) target = $region17
    $region16: #{tpu_custom_call.1} parent=1 // pred_region
      %s188 = ssub.s32 128, 128
      %189 = vsyncadd [#allocation3], %s188
      %s191 = sshll.u32 [#allocation2], 4
      %s192 = int_to_ptr.vmem [resolvable:$true] %s191
      %194 = dma.vmem_to_hbm [thread:$0]  %s192, 128, %s3, [#allocation3]
    $region17: #{tpu_custom_call.1} parent=1 // pred_fallthru
      _
    // Predicated region
    $region18: #{tpu_custom_call.1} parent=1 // pred_check
      _
    $region19: #{tpu_custom_call.1} parent=1 // pred_check_branch
      %196 = sbr.rel (0) target = $region21
    $region20: #{tpu_custom_call.1} parent=1 // pred_region
      %s198 = ssub.s32 128, 128
      %199 = vsyncadd [#allocation5], %s198
      %s201 = sshll.u32 [#allocation4], 4
      %s202 = int_to_ptr.vmem [resolvable:$true] %s201
      %204 = dma.vmem_to_hbm [thread:$0]  %s202, 128, %s4, [#allocation5]
    $region21: #{tpu_custom_call.1} parent=1 // pred_fallthru
      _
    // Predicated region
    $region22: #{tpu_custom_call.1} parent=1 // pred_check
      _
    $region23: #{tpu_custom_call.1} parent=1 // pred_check_branch
      %206 = sbr.rel (0) target = $region25
    $region24: #{tpu_custom_call.1} parent=1 // pred_region
      %207 = dma.done [#allocation3], 128
    $region25: #{tpu_custom_call.1} parent=1 // pred_fallthru
      _
    // Predicated region
    $region26: #{tpu_custom_call.1} parent=1 // pred_check
      _
    $region27: #{tpu_custom_call.1} parent=1 // pred_check_branch
      %209 = sbr.rel (0) target = $region29
    $region28: #{tpu_custom_call.1} parent=1 // pred_region
      %210 = dma.done [#allocation5], 128
    $region29: #{tpu_custom_call.1} parent=1 // pred_fallthru
      _
    %211 = vsyncpa [#allocation3], 1
    %212 = vsyncpa [#allocation5], 1

</llo_original>
